<compile_context>
chip_gen: v5e
topology: v5e:2x2
jax: 0.10.0
libtpu: 0.0.40
codegen_flags: <defaults>
</compile_context>

<pallas_src>
import functools

import jax
import jax.numpy as jnp
from jax import lax
from jax.experimental import pallas as pl
from jax.experimental.pallas import tpu as pltpu

# ---- small synthetic config (mirrors the nn.Embedding shapes in __init__) ----
VOCAB = 64          # config.vocab_size
HIDDEN = 32         # config.hidden_size
MAX_POS = 32        # config.max_position_embeddings
TYPE_VOCAB = 2      # config.type_vocab_size
PAD_ID = 1          # config.pad_token_id (RoBERTa convention)
BATCH = 2
SEQ = 8


def _embeddings_kernel(pad_id, seq_len, tile_tokens,
                       ids_smem,            # scalar prefetch: (B*S,) int32 in SMEM
                       tt_ref,              # (T, 1) int32 tile (VMEM)
                       word_hbm, pos_hbm,   # (V, H), (P, H) f32 left in HBM
                       lang_ref,            # (2, H) f32 fused language table (VMEM)
                       out_ref,             # (T, H) f32 output tile
                       wbuf, pbuf, sem):    # scratch: gather buffers + DMA sems
    i = pl.program_id(0)
    T = tile_tokens
    S = seq_len

    # ---- issue one row-gather DMA per token for the word and position tables.
    # Position ids are computed scalar-side, exactly as
    # create_position_ids_from_input_ids: cumsum(mask) * mask + pad.
    def issue(t, count):
        s = t % S                                   # position within the sequence row
        g = i * T + t                               # flat token index (tiles align to rows)
        tok = ids_smem[g]
        count = jnp.where(s == 0, 0, count)         # reset running count at row start
        is_tok = (tok != pad_id).astype(jnp.int32)
        count = count + is_tok
        pos = count * is_tok + pad_id
        pltpu.make_async_copy(word_hbm.at[pl.ds(tok, 1)], wbuf.at[pl.ds(t, 1)],
                              sem.at[0, t]).start()
        pltpu.make_async_copy(pos_hbm.at[pl.ds(pos, 1)], pbuf.at[pl.ds(t, 1)],
                              sem.at[1, t]).start()
        return count

    lax.fori_loop(0, T, issue, jnp.int32(0))

    # ---- wait for all of this tile's gathers ----
    def wait(t, carry):
        pltpu.make_async_copy(word_hbm.at[pl.ds(0, 1)], wbuf.at[pl.ds(t, 1)],
                              sem.at[0, t]).wait()
        pltpu.make_async_copy(pos_hbm.at[pl.ds(0, 1)], pbuf.at[pl.ds(t, 1)],
                              sem.at[1, t]).wait()
        return carry

    lax.fori_loop(0, T, wait, 0)

    # ---- language embedding: exact select from the fused 2-row table ----
    tt_f = tt_ref[...].astype(jnp.float32)          # (T, 1), values in {0, 1}
    lang0 = lang_ref[0:1, :]                        # (1, H)
    lang1 = lang_ref[1:2, :]
    lang = lang0 + tt_f * (lang1 - lang0)           # (T, H)

    out_ref[...] = wbuf[...] + pbuf[...] + lang


def roberta_embeddings_qetag(input_ids, token_type_ids,
                             word_emb, pos_emb, tok_type_emb, lang_emb,
                             pad_id=PAD_ID, rows_per_tile=1):
    B, S = input_ids.shape
    H = word_emb.shape[1]
    TB = rows_per_tile
    assert B % TB == 0, "batch must be divisible by rows_per_tile"
    T = TB * S            # tokens per grid tile (aim for 256-1024 at production scale)
    N = B * S

    # Fold token_type_embeddings(zeros) = row 0 into the 2-row language table.
    lang_fused = (lang_emb + tok_type_emb[0][None, :]).astype(jnp.float32)

    ids_flat = input_ids.reshape(N).astype(jnp.int32)        # -> SMEM (scalar prefetch)
    tt_col = token_type_ids.reshape(N, 1).astype(jnp.int32)  # -> VMEM tiles

    kernel = functools.partial(_embeddings_kernel, pad_id, S, T)

    grid_spec = pltpu.PrefetchScalarGridSpec(
        num_scalar_prefetch=1,
        grid=(B // TB,),
        in_specs=[
            pl.BlockSpec((T, 1), lambda i, ids: (i, 0)),      # token_type ids tile
            pl.BlockSpec(memory_space=pl.ANY),                # word_emb stays in HBM
            pl.BlockSpec(memory_space=pl.ANY),                # pos_emb stays in HBM
            pl.BlockSpec((2, H), lambda i, ids: (0, 0)),      # fused language table
        ],
        out_specs=pl.BlockSpec((T, H), lambda i, ids: (i, 0)),
        scratch_shapes=[
            pltpu.VMEM((T, H), jnp.float32),                  # gathered word rows
            pltpu.VMEM((T, H), jnp.float32),                  # gathered position rows
            pltpu.SemaphoreType.DMA((2, T)),                  # one sem per in-flight DMA
        ],
    )

    out_flat = pl.pallas_call(
        kernel,
        out_shape=jax.ShapeDtypeStruct((N, H), jnp.float32),
        grid_spec=grid_spec,
        compiler_params=pltpu.CompilerParams(
            dimension_semantics=("parallel",)),
    )(ids_flat, tt_col, word_emb, pos_emb, lang_fused)
    return out_flat.reshape(B, S, H)


def _ref_forward(ids, tt, word_emb, pos_emb, tok_type_emb, lang_emb, pad_id):
    mask = (ids != pad_id).astype(jnp.int32)
    pos_ids = jnp.cumsum(mask, axis=1) * mask + pad_id
    return (word_emb[ids] + pos_emb[pos_ids]
            + tok_type_emb[0][None, None, :] + lang_emb[tt])


if __name__ == "__main__":
    key = jax.random.PRNGKey(0)
    k_ids, k_tt, k_w, k_p, k_t, k_l = jax.random.split(key, 6)

    # Deterministic synthetic parameters (N(0, 0.02) like BERT init).
    word_emb = 0.02 * jax.random.normal(k_w, (VOCAB, HIDDEN), jnp.float32)
    pos_emb = 0.02 * jax.random.normal(k_p, (MAX_POS, HIDDEN), jnp.float32)
    tok_type_emb = 0.02 * jax.random.normal(k_t, (TYPE_VOCAB, HIDDEN), jnp.float32)
    lang_emb = 0.02 * jax.random.normal(k_l, (2, HIDDEN), jnp.float32)
    # nn.Embedding(padding_idx=...) zeroes the padding row at init.
    word_emb = word_emb.at[PAD_ID].set(0.0)
    pos_emb = pos_emb.at[PAD_ID].set(0.0)
    # TODO(synk): LayerNorm/dropout params exist in __init__ but the PyTorch
    # forward discards their outputs, so they are not used here.

    # Inputs: token ids with trailing pads, binary language / token_type ids.
    input_ids = jax.random.randint(k_ids, (BATCH, SEQ), 2, VOCAB, dtype=jnp.int32)
    input_ids = input_ids.at[0, SEQ - 2:].set(PAD_ID)
    input_ids = input_ids.at[1, SEQ - 3:].set(PAD_ID)
    token_type_ids = jax.random.randint(k_tt, (BATCH, SEQ), 0, 2, dtype=jnp.int32)

    out = roberta_embeddings_qetag(input_ids, token_type_ids,
                                   word_emb, pos_emb, tok_type_emb, lang_emb)
    out = jax.block_until_ready(out)

    ref = _ref_forward(input_ids, token_type_ids,
                       word_emb, pos_emb, tok_type_emb, lang_emb, PAD_ID)
    assert out.shape == (BATCH, SEQ, HIDDEN)
    assert jnp.allclose(out, ref, atol=1e-5, rtol=1e-5), "mismatch vs JAX reference"

    print("KERNEL_OK")
</pallas_src>

<mosaic_0001>
module attributes {stable_mosaic.version = 11 : i64} {
  func.func @_embeddings_kernel(%arg0: i32, %arg1: memref<16xi32, #tpu.memory_space<smem>>, %arg2: memref<8x1xi32, #tpu.memory_space<vmem>>, %arg3: memref<64x32xf32, #tpu.memory_space<any>>, %arg4: memref<32x32xf32, #tpu.memory_space<any>>, %arg5: memref<2x32xf32, #tpu.memory_space<vmem>>, %arg6: memref<8x32xf32, #tpu.memory_space<vmem>>, %arg7: memref<8x32xf32, #tpu.memory_space<vmem>>, %arg8: memref<8x32xf32, #tpu.memory_space<vmem>>, %arg9: memref<2x8x!tpu.dma_semaphore, #tpu.memory_space<semaphore_mem>>) attributes {dimension_semantics = [#tpu.dimension_semantics<parallel>], iteration_bounds = array<i64: 2>, scalar_prefetch = 1 : i64, scratch_operands = 3 : i64, tpu.core_type = #tpu.core_type<tc>, window_params = [{transform_indices = @transform_0, window_bounds = array<i64: 8, 1>}, {}, {}, {pipeline_mode = #tpu.pipeline_mode<synchronous>, transform_indices = @transform_3, window_bounds = array<i64: 2, 32>}, {transform_indices = @transform_4, window_bounds = array<i64: 8, 32>}]} {
    %c0_i32 = arith.constant 0 : i32
    %c0_i32_0 = arith.constant 0 : i32
    %c8_i32 = arith.constant 8 : i32
    %0 = arith.addi %c0_i32_0, %c8_i32 : i32
    %c1_i32 = arith.constant 1 : i32
    %1 = scf.for %arg10 = %c0_i32_0 to %0 step %c1_i32 iter_args(%arg11 = %c0_i32) -> (i32)  : i32 {
      %c8_i32_16 = arith.constant 8 : i32
      %c0_i32_17 = arith.constant 0 : i32
      %18 = arith.cmpi eq, %c8_i32_16, %c0_i32_17 : i32
      %c1_i32_18 = arith.constant 1 : i32
      %19 = arith.select %18, %c1_i32_18, %c8_i32_16 : i32
      %20 = arith.remsi %arg10, %19 : i32
      %c0_i32_19 = arith.constant 0 : i32
      %21 = arith.cmpi ne, %20, %c0_i32_19 : i32
      %c0_i32_20 = arith.constant 0 : i32
      %22 = arith.cmpi slt, %20, %c0_i32_20 : i32
      %c0_i32_21 = arith.constant 0 : i32
      %23 = arith.cmpi slt, %19, %c0_i32_21 : i32
      %24 = arith.xori %22, %23 : i1
      %25 = arith.andi %24, %21 : i1
      %26 = arith.addi %20, %19 : i32
      %27 = arith.select %25, %26, %20 : i32
      %c8_i32_22 = arith.constant 8 : i32
      %28 = arith.muli %arg0, %c8_i32_22 : i32
      %29 = arith.addi %28, %arg10 : i32
      %30 = arith.index_cast %29 : i32 to index
      %31 = memref.load %arg1[%30] : memref<16xi32, #tpu.memory_space<smem>>
      %c0_i32_23 = arith.constant 0 : i32
      %32 = arith.cmpi eq, %27, %c0_i32_23 : i32
      %c0_i32_24 = arith.constant 0 : i32
      %33 = arith.select %32, %c0_i32_24, %arg11 : i32
      %c1_i32_25 = arith.constant 1 : i32
      %34 = arith.cmpi ne, %31, %c1_i32_25 : i32
      %35 = arith.extui %34 : i1 to i32
      %36 = arith.addi %33, %35 : i32
      %37 = arith.muli %36, %35 : i32
      %c1_i32_26 = arith.constant 1 : i32
      %38 = arith.addi %37, %c1_i32_26 : i32
      %c0_i32_27 = arith.constant 0 : i32
      %c0_i32_28 = arith.constant 0 : i32
      %39 = tpu.memref_slice %arg3[%31, %c0_i32_28] : memref<64x32xf32, #tpu.memory_space<any>> -> memref<1x32xf32, #tpu.memory_space<any>>
      %c0_i32_29 = arith.constant 0 : i32
      %40 = tpu.memref_slice %arg7[%arg10, %c0_i32_29] : memref<8x32xf32, #tpu.memory_space<vmem>> -> memref<1x32xf32, #tpu.memory_space<vmem>>
      %41 = tpu.memref_slice %arg9[%c0_i32_27, %arg10] : memref<2x8x!tpu.dma_semaphore, #tpu.memory_space<semaphore_mem>> -> memref<1x1x!tpu.dma_semaphore, #tpu.memory_space<semaphore_mem>>
      %42 = tpu.memref_squeeze %41 : memref<1x1x!tpu.dma_semaphore, #tpu.memory_space<semaphore_mem>> -> memref<!tpu.dma_semaphore, #tpu.memory_space<semaphore_mem>>
      tpu.enqueue_dma source(%39 : memref<1x32xf32, #tpu.memory_space<any>>) target(%40 : memref<1x32xf32, #tpu.memory_space<vmem>>) target_semaphore(%42 : memref<!tpu.dma_semaphore, #tpu.memory_space<semaphore_mem>>)
      %c1_i32_30 = arith.constant 1 : i32
      %c0_i32_31 = arith.constant 0 : i32
      %43 = tpu.memref_slice %arg4[%38, %c0_i32_31] : memref<32x32xf32, #tpu.memory_space<any>> -> memref<1x32xf32, #tpu.memory_space<any>>
      %c0_i32_32 = arith.constant 0 : i32
      %44 = tpu.memref_slice %arg8[%arg10, %c0_i32_32] : memref<8x32xf32, #tpu.memory_space<vmem>> -> memref<1x32xf32, #tpu.memory_space<vmem>>
      %45 = tpu.memref_slice %arg9[%c1_i32_30, %arg10] : memref<2x8x!tpu.dma_semaphore, #tpu.memory_space<semaphore_mem>> -> memref<1x1x!tpu.dma_semaphore, #tpu.memory_space<semaphore_mem>>
      %46 = tpu.memref_squeeze %45 : memref<1x1x!tpu.dma_semaphore, #tpu.memory_space<semaphore_mem>> -> memref<!tpu.dma_semaphore, #tpu.memory_space<semaphore_mem>>
      tpu.enqueue_dma source(%43 : memref<1x32xf32, #tpu.memory_space<any>>) target(%44 : memref<1x32xf32, #tpu.memory_space<vmem>>) target_semaphore(%46 : memref<!tpu.dma_semaphore, #tpu.memory_space<semaphore_mem>>)
      scf.yield %36 : i32
    }
    %c8_i32_1 = arith.constant 8 : i32
    %c0_i32_2 = arith.constant 0 : i32
    %c8_i32_3 = arith.constant 8 : i32
    %2 = arith.addi %c0_i32_2, %c8_i32_3 : i32
    %c1_i32_4 = arith.constant 1 : i32
    scf.for %arg10 = %c0_i32_2 to %2 step %c1_i32_4  : i32 {
      %c0_i32_16 = arith.constant 0 : i32
      %c0_i32_17 = arith.constant 0 : i32
      %c0_i32_18 = arith.constant 0 : i32
      %18 = tpu.memref_slice %arg3[%c0_i32_17, %c0_i32_18] : memref<64x32xf32, #tpu.memory_space<any>> -> memref<1x32xf32, #tpu.memory_space<any>>
      %c0_i32_19 = arith.constant 0 : i32
      %19 = tpu.memref_slice %arg7[%arg10, %c0_i32_19] : memref<8x32xf32, #tpu.memory_space<vmem>> -> memref<1x32xf32, #tpu.memory_space<vmem>>
      %20 = tpu.memref_slice %arg9[%c0_i32_16, %arg10] : memref<2x8x!tpu.dma_semaphore, #tpu.memory_space<semaphore_mem>> -> memref<1x1x!tpu.dma_semaphore, #tpu.memory_space<semaphore_mem>>
      %21 = tpu.memref_squeeze %20 : memref<1x1x!tpu.dma_semaphore, #tpu.memory_space<semaphore_mem>> -> memref<!tpu.dma_semaphore, #tpu.memory_space<semaphore_mem>>
      tpu.wait_dma2 semaphore(%21 : memref<!tpu.dma_semaphore, #tpu.memory_space<semaphore_mem>>) src(%18 : memref<1x32xf32, #tpu.memory_space<any>>) dst(%19 : memref<1x32xf32, #tpu.memory_space<vmem>>)
      %c1_i32_20 = arith.constant 1 : i32
      %c0_i32_21 = arith.constant 0 : i32
      %c0_i32_22 = arith.constant 0 : i32
      %22 = tpu.memref_slice %arg4[%c0_i32_21, %c0_i32_22] : memref<32x32xf32, #tpu.memory_space<any>> -> memref<1x32xf32, #tpu.memory_space<any>>
      %c0_i32_23 = arith.constant 0 : i32
      %23 = tpu.memref_slice %arg8[%arg10, %c0_i32_23] : memref<8x32xf32, #tpu.memory_space<vmem>> -> memref<1x32xf32, #tpu.memory_space<vmem>>
      %24 = tpu.memref_slice %arg9[%c1_i32_20, %arg10] : memref<2x8x!tpu.dma_semaphore, #tpu.memory_space<semaphore_mem>> -> memref<1x1x!tpu.dma_semaphore, #tpu.memory_space<semaphore_mem>>
      %25 = tpu.memref_squeeze %24 : memref<1x1x!tpu.dma_semaphore, #tpu.memory_space<semaphore_mem>> -> memref<!tpu.dma_semaphore, #tpu.memory_space<semaphore_mem>>
      tpu.wait_dma2 semaphore(%25 : memref<!tpu.dma_semaphore, #tpu.memory_space<semaphore_mem>>) src(%22 : memref<1x32xf32, #tpu.memory_space<any>>) dst(%23 : memref<1x32xf32, #tpu.memory_space<vmem>>)
    }
    %c8_i32_5 = arith.constant 8 : i32
    %c0 = arith.constant 0 : index
    %c0_6 = arith.constant 0 : index
    %3 = vector.load %arg2[%c0, %c0_6] : memref<8x1xi32, #tpu.memory_space<vmem>>, vector<8x1xi32>
    %4 = arith.sitofp %3 : vector<8x1xi32> to vector<8x1xf32>
    %c0_7 = arith.constant 0 : index
    %c0_8 = arith.constant 0 : index
    %5 = vector.load %arg5[%c0_7, %c0_8] : memref<2x32xf32, #tpu.memory_space<vmem>>, vector<1x32xf32>
    %c1 = arith.constant 1 : index
    %c0_9 = arith.constant 0 : index
    %6 = vector.load %arg5[%c1, %c0_9] : memref<2x32xf32, #tpu.memory_space<vmem>>, vector<1x32xf32>
    %7 = arith.subf %6, %5 : vector<1x32xf32>
    %8 = vector.broadcast %4 : vector<8x1xf32> to vector<8x32xf32>
    %9 = vector.broadcast %7 : vector<1x32xf32> to vector<8x32xf32>
    %10 = arith.mulf %8, %9 : vector<8x32xf32>
    %11 = vector.broadcast %5 : vector<1x32xf32> to vector<8x32xf32>
    %12 = arith.addf %11, %10 : vector<8x32xf32>
    %c0_10 = arith.constant 0 : index
    %c0_11 = arith.constant 0 : index
    %13 = vector.load %arg7[%c0_10, %c0_11] : memref<8x32xf32, #tpu.memory_space<vmem>>, vector<8x32xf32>
    %c0_12 = arith.constant 0 : index
    %c0_13 = arith.constant 0 : index
    %14 = vector.load %arg8[%c0_12, %c0_13] : memref<8x32xf32, #tpu.memory_space<vmem>>, vector<8x32xf32>
    %15 = arith.addf %13, %14 : vector<8x32xf32>
    %16 = arith.addf %15, %12 : vector<8x32xf32>
    %c0_14 = arith.constant 0 : index
    %c0_15 = arith.constant 0 : index
    %17 = vector.load %arg6[%c0_14, %c0_15] : memref<8x32xf32, #tpu.memory_space<vmem>>, vector<8x32xf32>
    tpu.vector_store %arg6[%c0_14, %c0_15], %16 {strides = array<i32>} : memref<8x32xf32, #tpu.memory_space<vmem>>, vector<8x32xf32>,
    return
  }
  func.func @transform_0(%arg0: i32, %arg1: memref<16xi32, #tpu.memory_space<smem>>) -> (i32, i32) {
    %c0_i32 = arith.constant 0 : i32
    %c0_i32_0 = arith.constant 0 : i32
    return %arg0, %c0_i32 : i32, i32
  }
  func.func @transform_3(%arg0: i32, %arg1: memref<16xi32, #tpu.memory_space<smem>>) -> (i32, i32) {
    %c0_i32 = arith.constant 0 : i32
    %c0_i32_0 = arith.constant 0 : i32
    %c0_i32_1 = arith.constant 0 : i32
    return %c0_i32, %c0_i32_0 : i32, i32
  }
  func.func @transform_4(%arg0: i32, %arg1: memref<16xi32, #tpu.memory_space<smem>>) -> (i32, i32) {
    %c0_i32 = arith.constant 0 : i32
    %c0_i32_0 = arith.constant 0 : i32
    return %arg0, %c0_i32 : i32, i32
  }
}

</mosaic_0001>

<llo_original>
// kernel: tpu_custom_call.1
$region0: #{tpu_custom_call.1}
  #allocation0 [shape = 'u32[]', space=smem, size = 0x4, offset = 0x4, fixed_abs, tag = 'smem constant byte address 0x4 - core index']
  #allocation1 [shape = 'u32[72,128]{1,0:T(1,128)}', space=vmem, size = 0x9000, scoped, tag = 'internal scratch']
  #allocation2 [shape = 'f32[8,32]{1,0:T(8,128)}', space=vmem, size = 0x1000, scoped, tag = 'scratch operand']
  #allocation3 [shape = 'f32[8,32]{1,0:T(8,128)}', space=vmem, size = 0x1000, scoped, tag = 'scratch operand']
  #allocation4 [shape = 's32[16]{0}', space=sflag, size = 0x40, scoped, tag = 'scratch operand']
  #allocation5 [shape = 's32[1]{0}', space=sflag, size = 0x4, scoped, tag = 'scoped memory for tpu_custom_call.1']
  #allocation6 [shape = 'u8[512]{0}', space=smem, size = 0x200, scoped, tag = 'prefetched SMEM operand 0']
  #allocation9 [shape = 's32[]', space=sflag, size = 0x4, offset = 0, fixed_abs, tag = 'sflag constant byte address 0x0 - dummy sync flag']
  #allocation10 [shape = 's32[]', space=sflag, size = 0x4, offset = 0, fixed_abs, tag = 'sflag constant byte address 0x0 - dummy sync flag']
  %s0 = inlined_call_operand.vmem [shape: s32[16], index: 0, kind: input, shape index: {}]
  %s1 = inlined_call_operand.vmem [shape: s32[16,1], index: 1, kind: input, shape index: {}]
  %s2 = inlined_call_operand.vmem [shape: f32[64,32], index: 2, kind: input, shape index: {}]
  %s3 = inlined_call_operand.vmem [shape: f32[32,32], index: 3, kind: input, shape index: {}]
  %s4 = inlined_call_operand.vmem [shape: f32[2,32], index: 4, kind: input, shape index: {}]
  %s5 = inlined_call_operand.hbm [shape: f32[16,32], index: 5, kind: output, shape index: {}]
  %s6 = sld [smem:[#allocation0]]
  $region115: #{tpu_custom_call.1} parent=0
    _
  %s8 = ssub.s32 1, %s6
  %s9 = scalar_select 0, %s8, %s6
  %s11 = sshll.u32 %s0, 4
  %s12 = int_to_ptr.vmem [resolvable:$true] %s11
  %14 = dma.vmem_to_smem %s12, 16, [#allocation6], [#allocation5]
  %16 = dma.done [#allocation5], 16
  %17 = sfence
  $region1: #{tpu_custom_call.1} parent=0
    #allocation7 [shape = 'u8[8192]{0}', space=vmem, size = 0x2000, scoped, tag = 'output window, operand 0']
    #allocation8 [shape = 's32[2]{0}', space=sflag, size = 0x8, scoped, tag = 'scoped memory for tpu_custom_call.1']
    %18 = vsyncpa [#allocation8], 0
    %s19 = scalar_lea.sflag [#allocation8], 1
    %20 = vsyncpa %s19, 0
    loop: start=0, step=1, limit=4
    $region2: #{tpu_custom_call.1} parent=1 // loop_pre_header
      _
    $region3: #{tpu_custom_call.1} parent=1 // loop_header
      %s22 = sphi 0, %s26
      %p23 = scmp.ge.s32.totalorder %s22, 4
      %s32 = sphi 0, %s34
      %s35 = sphi 0, %s32
      %s36 = sphi 0, %s35
      %s52 = sphi 0, %s36
      %s56 = sphi 0, %s56
      %s58 = sphi 0, %s56
      %s59 = sphi 0, %s58
      %s73 = sphi 0, %s59
      %s79 = sphi 0, %s81
      %s82 = sphi 0, %s79
      %s83 = sphi 0, %s82
      %s99 = sphi 0, %s83
    $region4: #{tpu_custom_call.1} parent=1 // loop_header_branch
      %25 = sbr.rel (%p23) target = $region8
    $region5: #{tpu_custom_call.1} parent=1 // loop_body
      %s27 = ssub.s32 %s22, 1
      %s28 = ssub.s32 %s22, 2
      %s29 = sadd.s32 %s22, 1
      %s30 = ssub.s32 %s22, %s29
      %p31 = scmp.eq.s32.totalorder %s30, 0
      %s33 = sadd.s32 %s32, 1
      %s34 = scalar_select %p31, %s32, %s33
      %p37 = pneg %p31
      %p38 = scmp.eq.s32.totalorder %s22, 1
      %p39 = por %p37, %p38
      %p40 = scmp.ne.s32.totalorder %s32, %s35
      %p41 = scmp.eq.s32.totalorder %s22, 0
      %p42 = por %p40, %p41
      %p43 = scmp.ne.s32.totalorder %s32, %s35
      %p44 = scmp.eq.s32.totalorder %s27, 1
      %p45 = por %p43, %p44
      %p46 = scmp.ne.s32.totalorder %s35, %s36
      %p47 = scmp.eq.s32.totalorder %s27, 0
      %p48 = por %p46, %p47
      %p49 = scmp.ne.s32.totalorder %s35, %s36
      %p50 = scmp.eq.s32.totalorder %s28, 1
      %p51 = por %p49, %p50
      %p53 = scmp.ne.s32.totalorder %s36, %s52
      %p54 = scmp.eq.s32.totalorder %s28, 0
      %p55 = por %p53, %p54
      %s57 = sadd.s32 %s56, 1
      %p60 = scmp.eq.s32.totalorder %s22, 1
      %p61 = scmp.ne.s32.totalorder %s56, %s58
      %p62 = scmp.eq.s32.totalorder %s22, 0
      %p63 = por %p61, %p62
      %p64 = scmp.ne.s32.totalorder %s56, %s58
      %p65 = scmp.eq.s32.totalorder %s27, 1
      %p66 = por %p64, %p65
      %p67 = scmp.ne.s32.totalorder %s58, %s59
      %p68 = scmp.eq.s32.totalorder %s27, 0
      %p69 = por %p67, %p68
      %p70 = scmp.ne.s32.totalorder %s58, %s59
      %p71 = scmp.eq.s32.totalorder %s28, 1
      %p72 = por %p70, %p71
      %p74 = scmp.ne.s32.totalorder %s59, %s73
      %p75 = scmp.eq.s32.totalorder %s28, 0
      %p76 = por %p74, %p75
      %s77 = ssub.s32 %s22, %s29
      %p78 = scmp.eq.s32.totalorder %s77, 0
      %s80 = sadd.s32 %s79, 1
      %s81 = scalar_select %p78, %s79, %s80
      %p84 = pneg %p78
      %p85 = scmp.eq.s32.totalorder %s22, 1
      %p86 = por %p84, %p85
      %p87 = scmp.ne.s32.totalorder %s79, %s82
      %p88 = scmp.eq.s32.totalorder %s22, 0
      %p89 = por %p87, %p88
      %p90 = scmp.ne.s32.totalorder %s79, %s82
      %p91 = scmp.eq.s32.totalorder %s27, 1
      %p92 = por %p90, %p91
      %p93 = scmp.ne.s32.totalorder %s82, %s83
      %p94 = scmp.eq.s32.totalorder %s27, 0
      %p95 = por %p93, %p94
      %p96 = scmp.ne.s32.totalorder %s82, %s83
      %p97 = scmp.eq.s32.totalorder %s28, 1
      %p98 = por %p96, %p97
      %p100 = scmp.ne.s32.totalorder %s83, %s99
      %p101 = scmp.eq.s32.totalorder %s28, 0
      %p102 = por %p100, %p101
      %p103 = scmp.le.s32.totalorder 1, %s22
      %p104 = scmp.lt.s32.totalorder %s22, 3
      %p105 = pnand %p103, %p104
      %p106 = pneg %p105
      // Predicated region
      $region9: #{tpu_custom_call.1} parent=5 // pred_check
        _
      $region10: #{tpu_custom_call.1} parent=5 // pred_check_branch
        %108 = sbr.rel (%p105) target = $region12
      $region11: #{tpu_custom_call.1} parent=5 // pred_region
        %s109 = ssub.s32 %s22, 1
        // Predicated region
        $region13: #{tpu_custom_call.1} parent=11 // pred_check
          %p110 = pneg %p69
        $region14: #{tpu_custom_call.1} parent=11 // pred_check_branch
          %112 = sbr.rel (%p110) target = $region16
        $region15: #{tpu_custom_call.1} parent=11 // pred_region
          _
        $region16: #{tpu_custom_call.1} parent=11 // pred_fallthru
          _
      $region12: #{tpu_custom_call.1} parent=5 // pred_fallthru
        _
      %p113 = scmp.lt.s32.totalorder %s22, 2
      // Predicated region
      $region17: #{tpu_custom_call.1} parent=5 // pred_check
        %p114 = pneg %p113
      $region18: #{tpu_custom_call.1} parent=5 // pred_check_branch
        %116 = sbr.rel (%p114) target = $region20
      $region19: #{tpu_custom_call.1} parent=5 // pred_region
        // Predicated region
        $region21: #{tpu_custom_call.1} parent=19 // pred_check
          %p117 = pneg %p42
        $region22: #{tpu_custom_call.1} parent=19 // pred_check_branch
          %119 = sbr.rel (%p117) target = $region24
        $region23: #{tpu_custom_call.1} parent=19 // pred_region
          %p120 = scmp.lt.s32.totalorder %s22, 1
          %s121 = scalar_select %p120, %s22, 1
          %s122 = smul.addr %s121, 8
          %s123 = scalar_lea.vmem %s1, %s122
        $region24: #{tpu_custom_call.1} parent=19 // pred_fallthru
          _
      $region20: #{tpu_custom_call.1} parent=5 // pred_fallthru
        _
      %p124 = scmp.le.s32.totalorder 1, %s22
      %p125 = scmp.lt.s32.totalorder %s22, 3
      %p126 = pnand %p124, %p125
      %p127 = pneg %p126
      // Predicated region
      $region25: #{tpu_custom_call.1} parent=5 // pred_check
        _
      $region26: #{tpu_custom_call.1} parent=5 // pred_check_branch
        %129 = sbr.rel (%p126) target = $region28
      $region27: #{tpu_custom_call.1} parent=5 // pred_region
        %s130 = ssub.s32 %s22, 1
        %p131 = scmp.lt.s32.totalorder %s27, 1
        %s132 = scalar_select %p131, %s27, 1
        %s133 = smul.addr %s132, 8
        %s134 = scalar_lea.vmem %s1, %s133
        %p135 = pneg %p48
        %p136 = pneg %p45
        %p137 = pneg %p69
        %p138 = pneg %p66
        %p139 = pneg %p95
        %p140 = pneg %p92
        %s141 = sand.u32 %s82, 1
        %s142 = scalar_lea.sflag [#allocation8], %s141
        %s143 = sand.u32 %s82, 1
        %s144 = smul.addr %s143, 8
        %s145 = scalar_lea.vmem [#allocation7], %s144
        %p146 = scmp.lt.s32.totalorder %s27, 1
        %s147 = scalar_select %p146, %s27, 1
        %s148 = smul.addr %s147, 8
        %s149 = scalar_lea.vmem %s1, %s148
        loop: start=0, step=1, limit=8
        $region29: #{tpu_custom_call.1} parent=27 // loop_pre_header
          _
        $region30: #{tpu_custom_call.1} parent=27 // loop_header
          %s151 = sphi 0, %s155
          %p152 = scmp.ge.s32.totalorder %s151, 8
          %s156 = sphi 0, %s176
        $region31: #{tpu_custom_call.1} parent=27 // loop_header_branch
          %154 = sbr.rel (%p152) target = $region35
        $region32: #{tpu_custom_call.1} parent=27 // loop_body
          %p157 = scmp.lt.s32.totalorder %s151, 0
          %s158 = ssub.s32 0, %s151
          %s159 = scalar_select %p157, %s158, %s151
          %s160 = sand.u32 %s159, 7
          %s161 = ssub.s32 0, %s160
          %s162 = scalar_select %p157, %s161, %s160
          %p163 = scmp.ne.s32.totalorder %s162, 0
          %p164 = scmp.lt.s32.totalorder %s162, 0
          %p165 = pnand %p164, %p163
          %p166 = pneg %p165
          %s167 = sadd.s32 %s162, 8
          %s168 = scalar_select %p166, %s167, %s162
          %s169 = smul.u32 %s27, 8
          %s170 = sadd.s32 %s169, %s151
          %s171 = sld [smem:[#allocation6 + %s170]]
          %p172 = scmp.eq.s32.totalorder %s168, 0
          %s173 = scalar_select %p172, 0, %s156
          %p174 = scmp.ne.s32.totalorder %s171, 1
          %s175 = scalar_select %p174, 1, 0
          %s176 = sadd.s32 %s173, %s175
          %s177 = smul.u32 %s176, %s175
          %s178 = sadd.s32 %s177, 1
          %s179 = scalar_lea.vmem %s2, %s171
          %s180 = scalar_lea.vmem [#allocation2], %s151
          %s181 = scalar_lea.sflag [#allocation4], %s151
          // Predicated region
          $region36: #{tpu_custom_call.1} parent=32 // pred_check
            _
          $region37: #{tpu_custom_call.1} parent=32 // pred_check_branch
            %183 = sbr.rel target = $region39
          $region38: #{tpu_custom_call.1} parent=32 // pred_region
            // Predicated region
            $region51: #{tpu_custom_call.1} parent=38 // pred_check
              _
            $region52: #{tpu_custom_call.1} parent=38 // pred_check_branch
              %199 = sbr.rel (0) target = $region54
            $region53: #{tpu_custom_call.1} parent=38 // pred_region
              %s201 = ssub.s32 2, 1
              loop: start=0, step=1, limit=1
              $region55: #{tpu_custom_call.1} parent=53 // loop_pre_header
                _
              $region56: #{tpu_custom_call.1} parent=53 // loop_header
                %s203 = sphi 0, %s207
                %p204 = scmp.ge.s32.totalorder %s203, 1
                %s208 = sphi %s179, %s179
                %s209 = sphi %s180, %s180
              $region57: #{tpu_custom_call.1} parent=53 // loop_header_branch
                %206 = sbr.rel (%p204) target = $region61
              $region58: #{tpu_custom_call.1} parent=53 // loop_body
                %v210 = vld [vmem:[%s208] sm:%s201]
                %211 = vst [vmem:[%s209] sm:%s201] %v210
              $region59: #{tpu_custom_call.1} parent=53 // loop_footer
                %s207 = sadd.s32 1, %s203
              $region60: #{tpu_custom_call.1} parent=53 // loop_footer_branch
                %202 = sbr.rel target = $region56
              $region61: #{tpu_custom_call.1} parent=53 // loop_exit
                _
            $region54: #{tpu_custom_call.1} parent=38 // pred_fallthru
              _
          $region39: #{tpu_custom_call.1} parent=32 // pred_fallthru
            _
          // Predicated region
          $region40: #{tpu_custom_call.1} parent=32 // pred_check
            _
          $region41: #{tpu_custom_call.1} parent=32 // pred_check_branch
            %185 = sbr.rel (0) target = $region43
          $region42: #{tpu_custom_call.1} parent=32 // pred_region
            %s187 = ssub.s32 2, 1
            loop: start=0, step=1, limit=1
            $region44: #{tpu_custom_call.1} parent=42 // loop_pre_header
              _
            $region45: #{tpu_custom_call.1} parent=42 // loop_header
              %s189 = sphi 0, %s193
              %p190 = scmp.ge.s32.totalorder %s189, 1
              %s194 = sphi %s179, %s179
              %s195 = sphi %s180, %s180
            $region46: #{tpu_custom_call.1} parent=42 // loop_header_branch
              %192 = sbr.rel (%p190) target = $region50
            $region47: #{tpu_custom_call.1} parent=42 // loop_body
              %v196 = vld [vmem:[%s194] sm:%s187]
              %197 = vst [vmem:[%s195] sm:%s187] %v196
            $region48: #{tpu_custom_call.1} parent=42 // loop_footer
              %s193 = sadd.s32 1, %s189
            $region49: #{tpu_custom_call.1} parent=42 // loop_footer_branch
              %188 = sbr.rel target = $region45
            $region50: #{tpu_custom_call.1} parent=42 // loop_exit
              _
          $region43: #{tpu_custom_call.1} parent=32 // pred_fallthru
            _
          // Predicated region
          $region62: #{tpu_custom_call.1} parent=32 // pred_check
            _
          $region63: #{tpu_custom_call.1} parent=32 // pred_check_branch
            %214 = sbr.rel (0) target = $region65
          $region64: #{tpu_custom_call.1} parent=32 // pred_region
            %215 = vsyncadd %s181, 16
          $region65: #{tpu_custom_call.1} parent=32 // pred_fallthru
            _
          %s216 = scalar_lea.vmem %s3, %s178
          %s217 = scalar_lea.vmem [#allocation3], %s151
          %s218 = sadd.s32 %s151, 8
          %s219 = scalar_lea.sflag [#allocation4], %s218
          // Predicated region
          $region66: #{tpu_custom_call.1} parent=32 // pred_check
            _
          $region67: #{tpu_custom_call.1} parent=32 // pred_check_branch
            %221 = sbr.rel target = $region69
          $region68: #{tpu_custom_call.1} parent=32 // pred_region
            // Predicated region
            $region81: #{tpu_custom_call.1} parent=68 // pred_check
              _
            $region82: #{tpu_custom_call.1} parent=68 // pred_check_branch
              %237 = sbr.rel (0) target = $region84
            $region83: #{tpu_custom_call.1} parent=68 // pred_region
              %s239 = ssub.s32 2, 1
              loop: start=0, step=1, limit=1
              $region85: #{tpu_custom_call.1} parent=83 // loop_pre_header
                _
              $region86: #{tpu_custom_call.1} parent=83 // loop_header
                %s241 = sphi 0, %s245
                %p242 = scmp.ge.s32.totalorder %s241, 1
                %s246 = sphi %s216, %s216
                %s247 = sphi %s217, %s217
              $region87: #{tpu_custom_call.1} parent=83 // loop_header_branch
                %244 = sbr.rel (%p242) target = $region91
              $region88: #{tpu_custom_call.1} parent=83 // loop_body
                %v248 = vld [vmem:[%s246] sm:%s239]
                %249 = vst [vmem:[%s247] sm:%s239] %v248
              $region89: #{tpu_custom_call.1} parent=83 // loop_footer
                %s245 = sadd.s32 1, %s241
              $region90: #{tpu_custom_call.1} parent=83 // loop_footer_branch
                %240 = sbr.rel target = $region86
              $region91: #{tpu_custom_call.1} parent=83 // loop_exit
                _
            $region84: #{tpu_custom_call.1} parent=68 // pred_fallthru
              _
          $region69: #{tpu_custom_call.1} parent=32 // pred_fallthru
            _
          // Predicated region
          $region70: #{tpu_custom_call.1} parent=32 // pred_check
            _
          $region71: #{tpu_custom_call.1} parent=32 // pred_check_branch
            %223 = sbr.rel (0) target = $region73
          $region72: #{tpu_custom_call.1} parent=32 // pred_region
            %s225 = ssub.s32 2, 1
            loop: start=0, step=1, limit=1
            $region74: #{tpu_custom_call.1} parent=72 // loop_pre_header
              _
            $region75: #{tpu_custom_call.1} parent=72 // loop_header
              %s227 = sphi 0, %s231
              %p228 = scmp.ge.s32.totalorder %s227, 1
              %s232 = sphi %s216, %s216
              %s233 = sphi %s217, %s217
            $region76: #{tpu_custom_call.1} parent=72 // loop_header_branch
              %230 = sbr.rel (%p228) target = $region80
            $region77: #{tpu_custom_call.1} parent=72 // loop_body
              %v234 = vld [vmem:[%s232] sm:%s225]
              %235 = vst [vmem:[%s233] sm:%s225] %v234
            $region78: #{tpu_custom_call.1} parent=72 // loop_footer
              %s231 = sadd.s32 1, %s227
            $region79: #{tpu_custom_call.1} parent=72 // loop_footer_branch
              %226 = sbr.rel target = $region75
            $region80: #{tpu_custom_call.1} parent=72 // loop_exit
              _
          $region73: #{tpu_custom_call.1} parent=32 // pred_fallthru
            _
          // Predicated region
          $region92: #{tpu_custom_call.1} parent=32 // pred_check
            _
          $region93: #{tpu_custom_call.1} parent=32 // pred_check_branch
            %252 = sbr.rel (0) target = $region95
          $region94: #{tpu_custom_call.1} parent=32 // pred_region
            %253 = vsyncadd %s219, 16
          $region95: #{tpu_custom_call.1} parent=32 // pred_fallthru
            _
        $region33: #{tpu_custom_call.1} parent=27 // loop_footer
          %s155 = sadd.s32 1, %s151
        $region34: #{tpu_custom_call.1} parent=27 // loop_footer_branch
          %150 = sbr.rel target = $region30
        $region35: #{tpu_custom_call.1} parent=27 // loop_exit
          _
        loop: start=0, step=1, limit=8
        $region96: #{tpu_custom_call.1} parent=27 // loop_pre_header
          _
        $region97: #{tpu_custom_call.1} parent=27 // loop_header
          %s255 = sphi 0, %s259
          %p256 = scmp.ge.s32.totalorder %s255, 8
        $region98: #{tpu_custom_call.1} parent=27 // loop_header_branch
          %258 = sbr.rel (%p256) target = $region102
        $region99: #{tpu_custom_call.1} parent=27 // loop_body
          %s260 = scalar_lea.sflag [#allocation4], %s255
          %s261 = smul.u32 1, 1
          %s262 = sshll.u32 %s261, 4
          %263 = dma.done %s260, %s262
          %s264 = sadd.s32 %s255, 8
          %s265 = scalar_lea.sflag [#allocation4], %s264
          %s266 = sshll.u32 %s261, 4
          %267 = dma.done %s265, %s266
        $region100: #{tpu_custom_call.1} parent=27 // loop_footer
          %s259 = sadd.s32 1, %s255
        $region101: #{tpu_custom_call.1} parent=27 // loop_footer_branch
          %254 = sbr.rel target = $region97
        $region102: #{tpu_custom_call.1} parent=27 // loop_exit
          _
        %v268 = vld [vmem:[%s149] sm:$0xff]
        %v269 = vcvt.s32.f32 %v268
        %v270 = vld [vmem:[%s4] sm:$0x1]
        %v271 = vld [vmem:[%s4 + $0x1] sm:$0x1]
        %v272 = vsub.f32 %v271, %v270
        %274 = vset.pattern.permute.xlu0 0
        %275 = vperm.xlu0 %274, %v269
        %v276 = vpop.permute.xlu0 %275
        %v278 = vperm.slane %v272, 0
        %v279 = vmul.f32 %v276, %v278
        %v280 = vperm.slane %v270, 0
        %v281 = vadd.f32 %v280, %v279
        %v282 = vld [vmem:[#allocation2] sm:$0xff]
        %v283 = vld [vmem:[#allocation3] sm:$0xff]
        %v284 = vadd.f32 %v282, %v283
        %v285 = vadd.f32 %v284, %v281
        %vm286 = vcmask 261120
        %287 = vst.msk [vmem:[%s145] sm:$0xff] %vm286, %v285
        %s288 = sand.u32 %s82, 1
        %s289 = scalar_lea.sflag [#allocation8], %s288
        %s290 = sand.u32 %s82, 1
        %s291 = smul.addr %s290, 8
        %s292 = scalar_lea.vmem [#allocation7], %s291
        // Predicated region
        $region103: #{tpu_custom_call.1} parent=27 // pred_check
          %p293 = pneg %p92
        $region104: #{tpu_custom_call.1} parent=27 // pred_check_branch
          %295 = sbr.rel (%p293) target = $region106
        $region105: #{tpu_custom_call.1} parent=27 // pred_region
          %297 = vsyncadd %s289, 0
          %s298 = smul.addr %s27, 8
          %s299 = scalar_lea.hbm %s5, %s298
          %s301 = sshll.u32 %s292, 4
          %s302 = int_to_ptr.vmem [resolvable:$true] %s301
          %s303 = sshll.u32 %s299, 4
          %s304 = int_to_ptr.hbm [resolvable:$true] %s303
          %306 = dma.vmem_to_hbm [thread:$0]  %s302, 128, %s304, %s289
        $region106: #{tpu_custom_call.1} parent=27 // pred_fallthru
          _
      $region28: #{tpu_custom_call.1} parent=5 // pred_fallthru
        _
      %p307 = scmp.le.s32.totalorder 2, %s22
      // Predicated region
      $region107: #{tpu_custom_call.1} parent=5 // pred_check
        %p308 = pneg %p307
      $region108: #{tpu_custom_call.1} parent=5 // pred_check_branch
        %310 = sbr.rel (%p308) target = $region110
      $region109: #{tpu_custom_call.1} parent=5 // pred_region
        %s311 = ssub.s32 %s22, 2
        // Predicated region
        $region111: #{tpu_custom_call.1} parent=109 // pred_check
          %p312 = pneg %p98
        $region112: #{tpu_custom_call.1} parent=109 // pred_check_branch
          %314 = sbr.rel (%p312) target = $region114
        $region113: #{tpu_custom_call.1} parent=109 // pred_region
          %s315 = sand.u32 %s83, 1
          %s316 = scalar_lea.sflag [#allocation8], %s315
          %s317 = sand.u32 %s83, 1
          %s318 = smul.addr %s317, 8
          %s319 = scalar_lea.vmem [#allocation7], %s318
          %321 = dma.done %s316, 128
        $region114: #{tpu_custom_call.1} parent=109 // pred_fallthru
          _
      $region110: #{tpu_custom_call.1} parent=5 // pred_fallthru
        _
    $region6: #{tpu_custom_call.1} parent=1 // loop_footer
      %s26 = sadd.s32 1, %s22
    $region7: #{tpu_custom_call.1} parent=1 // loop_footer_branch
      %21 = sbr.rel target = $region3
    $region8: #{tpu_custom_call.1} parent=1 // loop_exit
      _
    %322 = vsyncpa [#allocation8], 1
    %s323 = scalar_lea.sflag [#allocation8], 1
    %324 = vsyncpa %s323, 1
  %325 = vsyncmov [#allocation4]
  %s326 = vpop.sfrf %325
  %p327 = scmp.eq.s32.totalorder %s326, 0
  %p328 = pneg %p327
  %330 = shalt.err (%p328)
  %s331 = scalar_lea.sflag [#allocation4], 1
  %332 = vsyncmov %s331
  %s333 = vpop.sfrf %332
  %p334 = scmp.eq.s32.totalorder %s333, 0
  %p335 = pneg %p334
  %337 = shalt.err (%p335)
  %s338 = scalar_lea.sflag [#allocation4], 2
  %339 = vsyncmov %s338
  %s340 = vpop.sfrf %339
  %p341 = scmp.eq.s32.totalorder %s340, 0
  %p342 = pneg %p341
  %344 = shalt.err (%p342)
  %s345 = scalar_lea.sflag [#allocation4], 3
  %346 = vsyncmov %s345
  %s347 = vpop.sfrf %346
  %p348 = scmp.eq.s32.totalorder %s347, 0
  %p349 = pneg %p348
  %351 = shalt.err (%p349)
  %s352 = scalar_lea.sflag [#allocation4], 4
  %353 = vsyncmov %s352
  %s354 = vpop.sfrf %353
  %p355 = scmp.eq.s32.totalorder %s354, 0
  %p356 = pneg %p355
  %358 = shalt.err (%p356)
  %s359 = scalar_lea.sflag [#allocation4], 5
  %360 = vsyncmov %s359
  %s361 = vpop.sfrf %360
  %p362 = scmp.eq.s32.totalorder %s361, 0
  %p363 = pneg %p362
  %365 = shalt.err (%p363)
  %s366 = scalar_lea.sflag [#allocation4], 6
  %367 = vsyncmov %s366
  %s368 = vpop.sfrf %367
  %p369 = scmp.eq.s32.totalorder %s368, 0
  %p370 = pneg %p369
  %372 = shalt.err (%p370)
  %s373 = scalar_lea.sflag [#allocation4], 7
  %374 = vsyncmov %s373
  %s375 = vpop.sfrf %374
  %p376 = scmp.eq.s32.totalorder %s375, 0
  %p377 = pneg %p376
  %379 = shalt.err (%p377)
  %s380 = scalar_lea.sflag [#allocation4], 8
  %381 = vsyncmov %s380
  %s382 = vpop.sfrf %381
  %p383 = scmp.eq.s32.totalorder %s382, 0
  %p384 = pneg %p383
  %386 = shalt.err (%p384)
  %s387 = scalar_lea.sflag [#allocation4], 9
  %388 = vsyncmov %s387
  %s389 = vpop.sfrf %388
  %p390 = scmp.eq.s32.totalorder %s389, 0
  %p391 = pneg %p390
  %393 = shalt.err (%p391)
  %s394 = scalar_lea.sflag [#allocation4], 10
  %395 = vsyncmov %s394
  %s396 = vpop.sfrf %395
  %p397 = scmp.eq.s32.totalorder %s396, 0
  %p398 = pneg %p397
  %400 = shalt.err (%p398)
  %s401 = scalar_lea.sflag [#allocation4], 11
  %402 = vsyncmov %s401
  %s403 = vpop.sfrf %402
  %p404 = scmp.eq.s32.totalorder %s403, 0
  %p405 = pneg %p404
  %407 = shalt.err (%p405)
  %s408 = scalar_lea.sflag [#allocation4], 12
  %409 = vsyncmov %s408
  %s410 = vpop.sfrf %409
  %p411 = scmp.eq.s32.totalorder %s410, 0
  %p412 = pneg %p411
  %414 = shalt.err (%p412)
  %s415 = scalar_lea.sflag [#allocation4], 13
  %416 = vsyncmov %s415
  %s417 = vpop.sfrf %416
  %p418 = scmp.eq.s32.totalorder %s417, 0
  %p419 = pneg %p418
  %421 = shalt.err (%p419)
  %s422 = scalar_lea.sflag [#allocation4], 14
  %423 = vsyncmov %s422
  %s424 = vpop.sfrf %423
  %p425 = scmp.eq.s32.totalorder %s424, 0
  %p426 = pneg %p425
  %428 = shalt.err (%p426)
  %s429 = scalar_lea.sflag [#allocation4], 15
  %430 = vsyncmov %s429
  %s431 = vpop.sfrf %430
  %p432 = scmp.eq.s32.totalorder %s431, 0
  %p433 = pneg %p432
  %435 = shalt.err (%p433)

</llo_original>
